<compile_context>
chip_gen: v5e
topology: v5e:2x2
jax: 0.10.0
libtpu: 0.0.40
codegen_flags: <defaults>
</compile_context>

<pallas_src>
import functools

import jax
import jax.numpy as jnp
from jax.experimental import pallas as pl
from jax.experimental.pallas import tpu as pltpu

_LANE = 128
_SUBLANE = 8


def _round_up(x, m):
    return ((x + m - 1) // m) * m


def _cdiv(a, b):
    return -(-a // b)


def _vmem_capacity_bytes():
    """Generation-aware VMEM capacity (v5e/v6e: 128 MiB, v7x: 64 MiB)."""
    try:
        info = pltpu.get_tpu_info()
        cap = getattr(info, "vmem_capacity_bytes", None)
        if cap:
            return int(cap)
    except Exception:
        pass
    return 64 * 1024 * 1024  # conservative fallback (v7x physical per-TC VMEM)


# ----------------------------- kernels --------------------------------------


def _mlp_kernel_resident(n_linear, compute_dtype, *refs):
    """All weights/biases resident in VMEM.

    refs = (x_ref, w0, b0, w1, b1, ..., w_{L-1}, b_{L-1}, o_ref)
    Weights are (in_p, out_p) lane-padded, pre-transposed; biases (1, out_p) f32.
    """
    x_ref, o_ref = refs[0], refs[-1]
    params = refs[1:-1]

    h = x_ref[...].astype(compute_dtype)
    for li in range(n_linear):
        w_ref, b_ref = params[2 * li], params[2 * li + 1]
        acc = jnp.dot(h, w_ref[...], preferred_element_type=jnp.float32)
        acc = acc + b_ref[...].astype(jnp.float32)
        if li != n_linear - 1:
            # Carry activations in compute_dtype (bf16): halves VMEM + vld traffic.
            h = jnp.maximum(acc, 0.0).astype(compute_dtype)
        else:
            o_ref[...] = acc.astype(o_ref.dtype)


def _mlp_kernel_streaming(n_linear, compute_dtype, dims_p, *refs):
    """Weights stay in HBM; per-layer slabs are double-buffered into VMEM.

    refs = (x_ref, w_hbm_0..w_hbm_{L-1}, b_0..b_{L-1}, o_ref, wbuf, sem)
    Layer-(i+1) weight DMA is issued before layer-i's matmul so HBM fetch hides
    behind MXU work.
    """
    x_ref = refs[0]
    w_refs = refs[1:1 + n_linear]
    b_refs = refs[1 + n_linear:1 + 2 * n_linear]
    o_ref = refs[1 + 2 * n_linear]
    wbuf = refs[2 + 2 * n_linear]
    sem = refs[3 + 2 * n_linear]

    def w_copy(li, slot):
        in_p, out_p = dims_p[li]
        return pltpu.make_async_copy(
            w_refs[li], wbuf.at[slot, :in_p, :out_p], sem.at[slot])

    w_copy(0, 0).start()
    h = x_ref[...].astype(compute_dtype)
    for li in range(n_linear):
        slot = li & 1
        in_p, out_p = dims_p[li]
        if li + 1 < n_linear:
            w_copy(li + 1, 1 - slot).start()  # prefetch next layer's weights
        w_copy(li, slot).wait()
        acc = jnp.dot(h, wbuf[slot, :in_p, :out_p],
                      preferred_element_type=jnp.float32)
        acc = acc + b_refs[li][...].astype(jnp.float32)
        if li != n_linear - 1:
            h = jnp.maximum(acc, 0.0).astype(compute_dtype)
        else:
            o_ref[...] = acc.astype(o_ref.dtype)


# ----------------------------- wrapper ---------------------------------------


def prepare_params(params, *, param_dtype=jnp.bfloat16):
    """Hoisted weight prep: pad to 128 lanes, transpose to (in, out), cast.

    params: list of (W, b) with W shaped (out_features, in_features) like torch.
    Call once and reuse the result across mlp_forward invocations.
    """
    weights, biases, dims = [], [], []
    for (w, b) in params:
        w = jnp.asarray(w, jnp.float32)
        b = jnp.asarray(b, jnp.float32)
        out_f, in_f = w.shape
        in_p, out_p = _round_up(in_f, _LANE), _round_up(out_f, _LANE)
        w_t = jnp.pad(w.T, ((0, in_p - in_f), (0, out_p - out_f))).astype(param_dtype)
        b_p = jnp.pad(b, (0, out_p - out_f)).reshape(1, out_p)  # stays f32
        weights.append(w_t)
        biases.append(b_p)
        dims.append((in_f, out_f, in_p, out_p))
    return {
        "weights": tuple(weights),
        "biases": tuple(biases),
        "dims": tuple(dims),
        "param_dtype": jnp.dtype(param_dtype),
    }


def _select_tiling(B, requested_tile, min_grid_steps, footprint_fn, vmem_limit,
                   allow_resident=True):
    """Pick (tile_b, n_steps, resident) so the working set fits the VMEM budget."""
    B8 = _round_up(max(B, 1), _SUBLANE)
    max_steps = max(1, B8 // _SUBLANE)
    requested_tile = max(_SUBLANE, _round_up(int(requested_tile), _SUBLANE))

    def tile_for(steps):
        return _round_up(_cdiv(B8, steps), _SUBLANE)

    if allow_resident:
        # Waste-aware: split B into >= min_grid_steps tiles (megacore + pipelining)
        # rather than padding B up to a multiple of `requested_tile`.
        n_steps = min(max(min_grid_steps, _cdiv(B8, requested_tile)), max_steps)
        tb = tile_for(n_steps)
        while footprint_fn(tb, True) > vmem_limit and n_steps < max_steps:
            n_steps = min(max_steps, n_steps * 2)
            tb = tile_for(n_steps)
        if footprint_fn(tb, True) <= vmem_limit:
            return tb, n_steps, True

    # Streaming fallback: weights are re-fetched from HBM every grid step, so
    # prefer the largest tile that fits to amortize that traffic.
    n_steps = min(max(1, min_grid_steps), max_steps)
    tb = tile_for(n_steps)
    while footprint_fn(tb, False) > vmem_limit and n_steps < max_steps:
        n_steps = min(max_steps, n_steps * 2)
        tb = tile_for(n_steps)
    return tb, n_steps, False


def mlp_forward(x, params=None, *, prepared=None, tile_b=512,
                param_dtype=jnp.bfloat16, out_dtype=None,
                min_grid_steps=2, force_streaming=False):
    """Fused MLP forward. Pass `prepared=prepare_params(params)` to amortize prep."""
    x = jnp.asarray(x)
    if prepared is None:
        prepared = prepare_params(params, param_dtype=param_dtype)
    weights, biases, dims = prepared["weights"], prepared["biases"], prepared["dims"]
    compute_dtype = prepared["param_dtype"]

    B, n_input = x.shape
    n_linear = len(weights)
    in_f0, _, n_input_p, _ = dims[0]
    _, n_output, _, n_output_p = dims[-1]
    assert n_input == in_f0, "x feature dim does not match first Linear layer"
    out_dtype = x.dtype if out_dtype is None else jnp.dtype(out_dtype)

    # ---- VMEM budget (generation-aware; ~85% of physical capacity).
    vmem_limit = int(0.85 * _vmem_capacity_bytes())

    cdt_size = jnp.dtype(compute_dtype).itemsize
    x_it = x.dtype.itemsize
    o_it = jnp.dtype(out_dtype).itemsize
    w_bytes = sum(int(w.size) * w.dtype.itemsize for w in weights)
    b_bytes = sum(int(b.size) * b.dtype.itemsize for b in biases)
    max_in_p = max(ip for (_, _, ip, _) in dims)
    max_out_p = max(op for (_, _, _, op) in dims)
    headroom = 4 << 20  # Mosaic internal scratch etc.

    def footprint(tb, resident):
        io = 2 * tb * (n_input_p * x_it + n_output_p * o_it)   # double-buffered x/out
        act = 2 * tb * max_out_p * (cdt_size + 4)               # live h + f32 accumulator
        wmem = (w_bytes + b_bytes) if resident else (
            2 * max_in_p * max_out_p * cdt_size + b_bytes)       # streaming slab + biases
        return io + act + wmem + headroom

    tb, n_steps, resident = _select_tiling(
        B, tile_b, min_grid_steps, footprint, vmem_limit,
        allow_resident=not force_streaming)

    B_p = tb * n_steps
    grid = (n_steps,)

    # ---- pad x only if needed (skip the extra HBM pass when already aligned).
    if (B_p, n_input_p) != (B, n_input):
        x_p = jnp.pad(x, ((0, B_p - B), (0, n_input_p - n_input)))
    else:
        x_p = x

    x_spec = pl.BlockSpec((tb, n_input_p), lambda i: (i, 0))
    out_spec = pl.BlockSpec((tb, n_output_p), lambda i: (i, 0))

    # Advisory cost estimate so XLA schedules the custom call sensibly.
    flops = sum(2 * B_p * ip * op for (_, _, ip, op) in dims)
    bytes_accessed = (int(x_p.size) * x_it + w_bytes + b_bytes
                      + B_p * n_output_p * o_it)
    cost = pl.CostEstimate(flops=int(flops), transcendentals=0,
                           bytes_accessed=int(bytes_accessed))

    if resident:
        flat = []
        for w, b in zip(weights, biases):
            flat.extend((w, b))
        kernel = functools.partial(_mlp_kernel_resident, n_linear, compute_dtype)
        in_specs = ([x_spec]
                    + [pl.BlockSpec(memory_space=pltpu.MemorySpace.VMEM)] * len(flat))
        scratch_shapes = ()
        operands = (x_p, *flat)
    else:
        dims_p = tuple((ip, op) for (_, _, ip, op) in dims)
        kernel = functools.partial(_mlp_kernel_streaming, n_linear, compute_dtype,
                                   dims_p)
        in_specs = ([x_spec]
                    + [pl.BlockSpec(memory_space=pl.ANY)] * n_linear
                    + [pl.BlockSpec(memory_space=pltpu.MemorySpace.VMEM)] * n_linear)
        scratch_shapes = (pltpu.VMEM((2, max_in_p, max_out_p), compute_dtype),
                          pltpu.SemaphoreType.DMA((2,)))
        operands = (x_p, *weights, *biases)

    out_padded = pl.pallas_call(
        kernel,
        out_shape=jax.ShapeDtypeStruct((B_p, n_output_p), out_dtype),
        grid_spec=pltpu.PrefetchScalarGridSpec(
            num_scalar_prefetch=0,
            grid=grid,
            in_specs=in_specs,
            out_specs=out_spec,
            scratch_shapes=scratch_shapes,
        ),
        compiler_params=pltpu.CompilerParams(
            dimension_semantics=("parallel",),
            vmem_limit_bytes=vmem_limit,
        ),
        cost_estimate=cost,
    )(*operands)

    if (B_p, n_output_p) != (B, n_output):
        return out_padded[:B, :n_output]
    return out_padded


# ----------------------------- reference / test ------------------------------


def init_params(key, n_input, n_output, n_hidden, n_layers):
    """Deterministic synthetic init (torch.nn.Linear layout: W=(out,in), b=(out,))."""
    dims = [(n_input, n_hidden)] + [(n_hidden, n_hidden)] * n_layers + [(n_hidden, n_output)]
    params = []
    for (fan_in, fan_out) in dims:
        key, kw, kb = jax.random.split(key, 3)
        bound = 1.0 / jnp.sqrt(fan_in)
        w = jax.random.uniform(kw, (fan_out, fan_in), jnp.float32, -bound, bound)
        b = jax.random.uniform(kb, (fan_out,), jnp.float32, -bound, bound)
        params.append((w, b))
    return params


def mlp_reference(x, params):
    h = x
    for i, (w, b) in enumerate(params):
        h = h @ w.T + b
        if i != len(params) - 1:
            h = jnp.maximum(h, 0.0)
    return h


if __name__ == "__main__":
    n_input, n_output, n_hidden, n_layers = 16, 4, 32, 2
    batch = 16

    key = jax.random.PRNGKey(0)
    key, kx = jax.random.split(key)
    x = jax.random.normal(kx, (batch, n_input), jnp.float32)
    params = init_params(key, n_input, n_output, n_hidden, n_layers)
    ref = mlp_reference(x, params)

    # Default fast path: bf16 weights + bf16 activations, f32 accumulate.
    # Weight prep hoisted out of the forward call (reused below).
    prep_bf16 = prepare_params(params, param_dtype=jnp.bfloat16)
    out = jax.block_until_ready(mlp_forward(x, prepared=prep_bf16, tile_b=512))
    assert out.shape == (batch, n_output)
    assert jnp.allclose(out, ref, atol=3e-2, rtol=3e-2), "bf16 path mismatch"

    # f32 exactness path (weights + activations stay f32).
    prep_f32 = prepare_params(params, param_dtype=jnp.float32)
    out_f32 = jax.block_until_ready(mlp_forward(x, prepared=prep_f32, tile_b=512))
    assert jnp.allclose(out_f32, ref, atol=1e-4, rtol=1e-4), "f32 path mismatch"

    # Exercise the HBM weight-streaming fallback (used when params outgrow VMEM).
    out_stream = jax.block_until_ready(
        mlp_forward(x, prepared=prep_bf16, tile_b=512, force_streaming=True))
    assert jnp.allclose(out_stream, ref, atol=3e-2, rtol=3e-2), "streaming path mismatch"

    print("KERNEL_OK")
</pallas_src>

<mosaic_0001>
module attributes {stable_mosaic.version = 11 : i64} {
  func.func @_mlp_kernel_resident(%arg0: i32, %arg1: memref<8x128xf32, #tpu.memory_space<vmem>>, %arg2: memref<128x128xbf16, #tpu.memory_space<vmem>>, %arg3: memref<1x128xf32, #tpu.memory_space<vmem>>, %arg4: memref<128x128xbf16, #tpu.memory_space<vmem>>, %arg5: memref<1x128xf32, #tpu.memory_space<vmem>>, %arg6: memref<128x128xbf16, #tpu.memory_space<vmem>>, %arg7: memref<1x128xf32, #tpu.memory_space<vmem>>, %arg8: memref<128x128xbf16, #tpu.memory_space<vmem>>, %arg9: memref<1x128xf32, #tpu.memory_space<vmem>>, %arg10: memref<8x128xf32, #tpu.memory_space<vmem>>) attributes {dimension_semantics = [#tpu.dimension_semantics<parallel>], iteration_bounds = array<i64: 2>, scalar_prefetch = 0 : i64, scratch_operands = 0 : i64, tpu.core_type = #tpu.core_type<tc>, window_params = [{transform_indices = @transform_0, window_bounds = array<i64: 8, 128>}, {pipeline_mode = #tpu.pipeline_mode<synchronous>, transform_indices = @transform_1, window_bounds = array<i64: 128, 128>}, {pipeline_mode = #tpu.pipeline_mode<synchronous>, transform_indices = @transform_2, window_bounds = array<i64: 1, 128>}, {pipeline_mode = #tpu.pipeline_mode<synchronous>, transform_indices = @transform_3, window_bounds = array<i64: 128, 128>}, {pipeline_mode = #tpu.pipeline_mode<synchronous>, transform_indices = @transform_4, window_bounds = array<i64: 1, 128>}, {pipeline_mode = #tpu.pipeline_mode<synchronous>, transform_indices = @transform_5, window_bounds = array<i64: 128, 128>}, {pipeline_mode = #tpu.pipeline_mode<synchronous>, transform_indices = @transform_6, window_bounds = array<i64: 1, 128>}, {pipeline_mode = #tpu.pipeline_mode<synchronous>, transform_indices = @transform_7, window_bounds = array<i64: 128, 128>}, {pipeline_mode = #tpu.pipeline_mode<synchronous>, transform_indices = @transform_8, window_bounds = array<i64: 1, 128>}, {transform_indices = @transform_9, window_bounds = array<i64: 8, 128>}]} {
    %c0 = arith.constant 0 : index
    %c0_0 = arith.constant 0 : index
    %0 = vector.load %arg1[%c0, %c0_0] : memref<8x128xf32, #tpu.memory_space<vmem>>, vector<8x128xf32>
    %1 = arith.truncf %0 : vector<8x128xf32> to vector<8x128xbf16>
    %c0_1 = arith.constant 0 : index
    %c0_2 = arith.constant 0 : index
    %2 = vector.load %arg2[%c0_1, %c0_2] : memref<128x128xbf16, #tpu.memory_space<vmem>>, vector<128x128xbf16>
    %cst = arith.constant dense<0.000000e+00> : vector<8x128xf32>
    %3 = tpu.matmul %1, %2, %cst {dimension_numbers = #tpu.dot_dimension_numbers<[1], [0], [0], [1], [0, 0, 1, 1], [], []>} : vector<8x128xbf16>, vector<128x128xbf16>, vector<8x128xf32> -> vector<8x128xf32>
    %c0_3 = arith.constant 0 : index
    %c0_4 = arith.constant 0 : index
    %4 = vector.load %arg3[%c0_3, %c0_4] : memref<1x128xf32, #tpu.memory_space<vmem>>, vector<1x128xf32>
    %5 = vector.broadcast %4 : vector<1x128xf32> to vector<8x128xf32>
    %6 = arith.addf %3, %5 : vector<8x128xf32>
    %cst_5 = arith.constant 0.000000e+00 : f32
    %7 = vector.broadcast %cst_5 : f32 to vector<8x128xf32>
    %8 = arith.maximumf %6, %7 : vector<8x128xf32>
    %9 = arith.truncf %8 : vector<8x128xf32> to vector<8x128xbf16>
    %c0_6 = arith.constant 0 : index
    %c0_7 = arith.constant 0 : index
    %10 = vector.load %arg4[%c0_6, %c0_7] : memref<128x128xbf16, #tpu.memory_space<vmem>>, vector<128x128xbf16>
    %cst_8 = arith.constant dense<0.000000e+00> : vector<8x128xf32>
    %11 = tpu.matmul %9, %10, %cst_8 {dimension_numbers = #tpu.dot_dimension_numbers<[1], [0], [0], [1], [0, 0, 1, 1], [], []>} : vector<8x128xbf16>, vector<128x128xbf16>, vector<8x128xf32> -> vector<8x128xf32>
    %c0_9 = arith.constant 0 : index
    %c0_10 = arith.constant 0 : index
    %12 = vector.load %arg5[%c0_9, %c0_10] : memref<1x128xf32, #tpu.memory_space<vmem>>, vector<1x128xf32>
    %13 = vector.broadcast %12 : vector<1x128xf32> to vector<8x128xf32>
    %14 = arith.addf %11, %13 : vector<8x128xf32>
    %cst_11 = arith.constant 0.000000e+00 : f32
    %15 = vector.broadcast %cst_11 : f32 to vector<8x128xf32>
    %16 = arith.maximumf %14, %15 : vector<8x128xf32>
    %17 = arith.truncf %16 : vector<8x128xf32> to vector<8x128xbf16>
    %c0_12 = arith.constant 0 : index
    %c0_13 = arith.constant 0 : index
    %18 = vector.load %arg6[%c0_12, %c0_13] : memref<128x128xbf16, #tpu.memory_space<vmem>>, vector<128x128xbf16>
    %cst_14 = arith.constant dense<0.000000e+00> : vector<8x128xf32>
    %19 = tpu.matmul %17, %18, %cst_14 {dimension_numbers = #tpu.dot_dimension_numbers<[1], [0], [0], [1], [0, 0, 1, 1], [], []>} : vector<8x128xbf16>, vector<128x128xbf16>, vector<8x128xf32> -> vector<8x128xf32>
    %c0_15 = arith.constant 0 : index
    %c0_16 = arith.constant 0 : index
    %20 = vector.load %arg7[%c0_15, %c0_16] : memref<1x128xf32, #tpu.memory_space<vmem>>, vector<1x128xf32>
    %21 = vector.broadcast %20 : vector<1x128xf32> to vector<8x128xf32>
    %22 = arith.addf %19, %21 : vector<8x128xf32>
    %cst_17 = arith.constant 0.000000e+00 : f32
    %23 = vector.broadcast %cst_17 : f32 to vector<8x128xf32>
    %24 = arith.maximumf %22, %23 : vector<8x128xf32>
    %25 = arith.truncf %24 : vector<8x128xf32> to vector<8x128xbf16>
    %c0_18 = arith.constant 0 : index
    %c0_19 = arith.constant 0 : index
    %26 = vector.load %arg8[%c0_18, %c0_19] : memref<128x128xbf16, #tpu.memory_space<vmem>>, vector<128x128xbf16>
    %cst_20 = arith.constant dense<0.000000e+00> : vector<8x128xf32>
    %27 = tpu.matmul %25, %26, %cst_20 {dimension_numbers = #tpu.dot_dimension_numbers<[1], [0], [0], [1], [0, 0, 1, 1], [], []>} : vector<8x128xbf16>, vector<128x128xbf16>, vector<8x128xf32> -> vector<8x128xf32>
    %c0_21 = arith.constant 0 : index
    %c0_22 = arith.constant 0 : index
    %28 = vector.load %arg9[%c0_21, %c0_22] : memref<1x128xf32, #tpu.memory_space<vmem>>, vector<1x128xf32>
    %29 = vector.broadcast %28 : vector<1x128xf32> to vector<8x128xf32>
    %30 = arith.addf %27, %29 : vector<8x128xf32>
    %c0_23 = arith.constant 0 : index
    %c0_24 = arith.constant 0 : index
    %31 = vector.load %arg10[%c0_23, %c0_24] : memref<8x128xf32, #tpu.memory_space<vmem>>, vector<8x128xf32>
    tpu.vector_store %arg10[%c0_23, %c0_24], %30 {strides = array<i32>} : memref<8x128xf32, #tpu.memory_space<vmem>>, vector<8x128xf32>,
    return
  }
  func.func @transform_0(%arg0: i32) -> (i32, i32) {
    %c0_i32 = arith.constant 0 : i32
    %c0_i32_0 = arith.constant 0 : i32
    return %arg0, %c0_i32 : i32, i32
  }
  func.func @transform_1(%arg0: i32) -> (i32, i32) {
    %c0_i32 = arith.constant 0 : i32
    %c0_i32_0 = arith.constant 0 : i32
    %c0_i32_1 = arith.constant 0 : i32
    return %c0_i32, %c0_i32_0 : i32, i32
  }
  func.func @transform_2(%arg0: i32) -> (i32, i32) {
    %c0_i32 = arith.constant 0 : i32
    %c0_i32_0 = arith.constant 0 : i32
    %c0_i32_1 = arith.constant 0 : i32
    return %c0_i32, %c0_i32_0 : i32, i32
  }
  func.func @transform_3(%arg0: i32) -> (i32, i32) {
    %c0_i32 = arith.constant 0 : i32
    %c0_i32_0 = arith.constant 0 : i32
    %c0_i32_1 = arith.constant 0 : i32
    return %c0_i32, %c0_i32_0 : i32, i32
  }
  func.func @transform_4(%arg0: i32) -> (i32, i32) {
    %c0_i32 = arith.constant 0 : i32
    %c0_i32_0 = arith.constant 0 : i32
    %c0_i32_1 = arith.constant 0 : i32
    return %c0_i32, %c0_i32_0 : i32, i32
  }
  func.func @transform_5(%arg0: i32) -> (i32, i32) {
    %c0_i32 = arith.constant 0 : i32
    %c0_i32_0 = arith.constant 0 : i32
    %c0_i32_1 = arith.constant 0 : i32
    return %c0_i32, %c0_i32_0 : i32, i32
  }
  func.func @transform_6(%arg0: i32) -> (i32, i32) {
    %c0_i32 = arith.constant 0 : i32
    %c0_i32_0 = arith.constant 0 : i32
    %c0_i32_1 = arith.constant 0 : i32
    return %c0_i32, %c0_i32_0 : i32, i32
  }
  func.func @transform_7(%arg0: i32) -> (i32, i32) {
    %c0_i32 = arith.constant 0 : i32
    %c0_i32_0 = arith.constant 0 : i32
    %c0_i32_1 = arith.constant 0 : i32
    return %c0_i32, %c0_i32_0 : i32, i32
  }
  func.func @transform_8(%arg0: i32) -> (i32, i32) {
    %c0_i32 = arith.constant 0 : i32
    %c0_i32_0 = arith.constant 0 : i32
    %c0_i32_1 = arith.constant 0 : i32
    return %c0_i32, %c0_i32_0 : i32, i32
  }
  func.func @transform_9(%arg0: i32) -> (i32, i32) {
    %c0_i32 = arith.constant 0 : i32
    %c0_i32_0 = arith.constant 0 : i32
    return %arg0, %c0_i32 : i32, i32
  }
}

</mosaic_0001>

<llo_original>
// kernel: tpu_custom_call.1
$region0: #{tpu_custom_call.1}
  #allocation0 [shape = 'u32[]', space=smem, size = 0x4, offset = 0x4, fixed_abs, tag = 'smem constant byte address 0x4 - core index']
  #allocation1 [shape = 'u32[72,128]{1,0:T(1,128)}', space=vmem, size = 0x9000, scoped, tag = 'internal scratch']
  %s0 = inlined_call_operand.hbm [shape: f32[16,128], index: 0, kind: input, shape index: {}]
  %s1 = inlined_call_operand.hbm [shape: bf16[128,128], index: 1, kind: input, shape index: {}]
  %s2 = inlined_call_operand.vmem [shape: f32[1,128], index: 2, kind: input, shape index: {}]
  %s3 = inlined_call_operand.hbm [shape: bf16[128,128], index: 3, kind: input, shape index: {}]
  %s4 = inlined_call_operand.vmem [shape: f32[1,128], index: 4, kind: input, shape index: {}]
  %s5 = inlined_call_operand.hbm [shape: bf16[128,128], index: 5, kind: input, shape index: {}]
  %s6 = inlined_call_operand.vmem [shape: f32[1,128], index: 6, kind: input, shape index: {}]
  %s7 = inlined_call_operand.hbm [shape: bf16[128,128], index: 7, kind: input, shape index: {}]
  %s8 = inlined_call_operand.vmem [shape: f32[1,128], index: 8, kind: input, shape index: {}]
  %s9 = inlined_call_operand.hbm [shape: f32[16,128], index: 9, kind: output, shape index: {}]
  %s10 = sld [smem:[#allocation0]]
  $region89: #{tpu_custom_call.1} parent=0
    _
  %s12 = ssub.s32 1, %s10
  %s13 = scalar_select 0, %s12, %s10
  $region1: #{tpu_custom_call.1} parent=0
    #allocation2 [shape = 'u8[8192]{0}', space=vmem, size = 0x2000, scoped, tag = 'input window, operand 0']
    #allocation3 [shape = 's32[2]{0}', space=sflag, size = 0x8, scoped, tag = 'scoped memory for tpu_custom_call.1']
    #allocation4 [shape = 's32[2]{0}', space=sflag, size = 0x8, scoped, tag = 'scoped memory for tpu_custom_call.1']
    #allocation5 [shape = 'u8[32768]{0}', space=vmem, size = 0x8000, scoped, tag = 'input window, operand 1, single buffered']
    #allocation6 [shape = 's32[1]{0}', space=sflag, size = 0x4, scoped, tag = 'scoped memory for tpu_custom_call.1']
    #allocation7 [shape = 'u8[32768]{0}', space=vmem, size = 0x8000, scoped, tag = 'input window, operand 3, single buffered']
    #allocation8 [shape = 'u8[32768]{0}', space=vmem, size = 0x8000, scoped, tag = 'input window, operand 5, single buffered']
    #allocation9 [shape = 's32[1]{0}', space=sflag, size = 0x4, scoped, tag = 'scoped memory for tpu_custom_call.1']
    #allocation10 [shape = 'u8[32768]{0}', space=vmem, size = 0x8000, scoped, tag = 'input window, operand 7, single buffered']
    #allocation11 [shape = 'u8[8192]{0}', space=vmem, size = 0x2000, scoped, tag = 'output window, operand 0']
    %14 = vsyncpa [#allocation3], 0
    %s15 = scalar_lea.sflag [#allocation3], 1
    %16 = vsyncpa %s15, 0
    %17 = vsyncpa [#allocation6], 0
    %18 = vsyncpa [#allocation9], 0
    %19 = vsyncpa [#allocation4], 0
    %s20 = scalar_lea.sflag [#allocation4], 1
    %21 = vsyncpa %s20, 0
    loop: start=0, step=1, limit=4
    $region2: #{tpu_custom_call.1} parent=1 // loop_pre_header
      _
    $region3: #{tpu_custom_call.1} parent=1 // loop_header
      %s23 = sphi 0, %s27
      %p24 = scmp.ge.s32.totalorder %s23, 4
      %s33 = sphi 0, %s35
      %s36 = sphi 0, %s33
      %s37 = sphi 0, %s36
      %s53 = sphi 0, %s37
      %s57 = sphi 0, %s57
      %s59 = sphi 0, %s57
      %s60 = sphi 0, %s59
      %s74 = sphi 0, %s60
      %s78 = sphi 0, %s78
      %s80 = sphi 0, %s78
      %s81 = sphi 0, %s80
      %s95 = sphi 0, %s81
      %s99 = sphi 0, %s99
      %s101 = sphi 0, %s99
      %s102 = sphi 0, %s101
      %s116 = sphi 0, %s102
      %s120 = sphi 0, %s120
      %s122 = sphi 0, %s120
      %s123 = sphi 0, %s122
      %s137 = sphi 0, %s123
      %s141 = sphi 0, %s141
      %s143 = sphi 0, %s141
      %s144 = sphi 0, %s143
      %s158 = sphi 0, %s144
      %s162 = sphi 0, %s162
      %s164 = sphi 0, %s162
      %s165 = sphi 0, %s164
      %s179 = sphi 0, %s165
      %s183 = sphi 0, %s183
      %s185 = sphi 0, %s183
      %s186 = sphi 0, %s185
      %s200 = sphi 0, %s186
      %s204 = sphi 0, %s204
      %s206 = sphi 0, %s204
      %s207 = sphi 0, %s206
      %s221 = sphi 0, %s207
      %s227 = sphi 0, %s229
      %s230 = sphi 0, %s227
      %s231 = sphi 0, %s230
      %s247 = sphi 0, %s231
    $region4: #{tpu_custom_call.1} parent=1 // loop_header_branch
      %26 = sbr.rel (%p24) target = $region8
    $region5: #{tpu_custom_call.1} parent=1 // loop_body
      %s28 = ssub.s32 %s23, 1
      %s29 = ssub.s32 %s23, 2
      %s30 = sadd.s32 %s23, 1
      %s31 = ssub.s32 %s23, %s30
      %p32 = scmp.eq.s32.totalorder %s31, 0
      %s34 = sadd.s32 %s33, 1
      %s35 = scalar_select %p32, %s33, %s34
      %p38 = pneg %p32
      %p39 = scmp.eq.s32.totalorder %s23, 1
      %p40 = por %p38, %p39
      %p41 = scmp.ne.s32.totalorder %s33, %s36
      %p42 = scmp.eq.s32.totalorder %s23, 0
      %p43 = por %p41, %p42
      %p44 = scmp.ne.s32.totalorder %s33, %s36
      %p45 = scmp.eq.s32.totalorder %s28, 1
      %p46 = por %p44, %p45
      %p47 = scmp.ne.s32.totalorder %s36, %s37
      %p48 = scmp.eq.s32.totalorder %s28, 0
      %p49 = por %p47, %p48
      %p50 = scmp.ne.s32.totalorder %s36, %s37
      %p51 = scmp.eq.s32.totalorder %s29, 1
      %p52 = por %p50, %p51
      %p54 = scmp.ne.s32.totalorder %s37, %s53
      %p55 = scmp.eq.s32.totalorder %s29, 0
      %p56 = por %p54, %p55
      %s58 = sadd.s32 %s57, 1
      %p61 = scmp.eq.s32.totalorder %s23, 1
      %p62 = scmp.ne.s32.totalorder %s57, %s59
      %p63 = scmp.eq.s32.totalorder %s23, 0
      %p64 = por %p62, %p63
      %p65 = scmp.ne.s32.totalorder %s57, %s59
      %p66 = scmp.eq.s32.totalorder %s28, 1
      %p67 = por %p65, %p66
      %p68 = scmp.ne.s32.totalorder %s59, %s60
      %p69 = scmp.eq.s32.totalorder %s28, 0
      %p70 = por %p68, %p69
      %p71 = scmp.ne.s32.totalorder %s59, %s60
      %p72 = scmp.eq.s32.totalorder %s29, 1
      %p73 = por %p71, %p72
      %p75 = scmp.ne.s32.totalorder %s60, %s74
      %p76 = scmp.eq.s32.totalorder %s29, 0
      %p77 = por %p75, %p76
      %s79 = sadd.s32 %s78, 1
      %p82 = scmp.eq.s32.totalorder %s23, 1
      %p83 = scmp.ne.s32.totalorder %s78, %s80
      %p84 = scmp.eq.s32.totalorder %s23, 0
      %p85 = por %p83, %p84
      %p86 = scmp.ne.s32.totalorder %s78, %s80
      %p87 = scmp.eq.s32.totalorder %s28, 1
      %p88 = por %p86, %p87
      %p89 = scmp.ne.s32.totalorder %s80, %s81
      %p90 = scmp.eq.s32.totalorder %s28, 0
      %p91 = por %p89, %p90
      %p92 = scmp.ne.s32.totalorder %s80, %s81
      %p93 = scmp.eq.s32.totalorder %s29, 1
      %p94 = por %p92, %p93
      %p96 = scmp.ne.s32.totalorder %s81, %s95
      %p97 = scmp.eq.s32.totalorder %s29, 0
      %p98 = por %p96, %p97
      %s100 = sadd.s32 %s99, 1
      %p103 = scmp.eq.s32.totalorder %s23, 1
      %p104 = scmp.ne.s32.totalorder %s99, %s101
      %p105 = scmp.eq.s32.totalorder %s23, 0
      %p106 = por %p104, %p105
      %p107 = scmp.ne.s32.totalorder %s99, %s101
      %p108 = scmp.eq.s32.totalorder %s28, 1
      %p109 = por %p107, %p108
      %p110 = scmp.ne.s32.totalorder %s101, %s102
      %p111 = scmp.eq.s32.totalorder %s28, 0
      %p112 = por %p110, %p111
      %p113 = scmp.ne.s32.totalorder %s101, %s102
      %p114 = scmp.eq.s32.totalorder %s29, 1
      %p115 = por %p113, %p114
      %p117 = scmp.ne.s32.totalorder %s102, %s116
      %p118 = scmp.eq.s32.totalorder %s29, 0
      %p119 = por %p117, %p118
      %s121 = sadd.s32 %s120, 1
      %p124 = scmp.eq.s32.totalorder %s23, 1
      %p125 = scmp.ne.s32.totalorder %s120, %s122
      %p126 = scmp.eq.s32.totalorder %s23, 0
      %p127 = por %p125, %p126
      %p128 = scmp.ne.s32.totalorder %s120, %s122
      %p129 = scmp.eq.s32.totalorder %s28, 1
      %p130 = por %p128, %p129
      %p131 = scmp.ne.s32.totalorder %s122, %s123
      %p132 = scmp.eq.s32.totalorder %s28, 0
      %p133 = por %p131, %p132
      %p134 = scmp.ne.s32.totalorder %s122, %s123
      %p135 = scmp.eq.s32.totalorder %s29, 1
      %p136 = por %p134, %p135
      %p138 = scmp.ne.s32.totalorder %s123, %s137
      %p139 = scmp.eq.s32.totalorder %s29, 0
      %p140 = por %p138, %p139
      %s142 = sadd.s32 %s141, 1
      %p145 = scmp.eq.s32.totalorder %s23, 1
      %p146 = scmp.ne.s32.totalorder %s141, %s143
      %p147 = scmp.eq.s32.totalorder %s23, 0
      %p148 = por %p146, %p147
      %p149 = scmp.ne.s32.totalorder %s141, %s143
      %p150 = scmp.eq.s32.totalorder %s28, 1
      %p151 = por %p149, %p150
      %p152 = scmp.ne.s32.totalorder %s143, %s144
      %p153 = scmp.eq.s32.totalorder %s28, 0
      %p154 = por %p152, %p153
      %p155 = scmp.ne.s32.totalorder %s143, %s144
      %p156 = scmp.eq.s32.totalorder %s29, 1
      %p157 = por %p155, %p156
      %p159 = scmp.ne.s32.totalorder %s144, %s158
      %p160 = scmp.eq.s32.totalorder %s29, 0
      %p161 = por %p159, %p160
      %s163 = sadd.s32 %s162, 1
      %p166 = scmp.eq.s32.totalorder %s23, 1
      %p167 = scmp.ne.s32.totalorder %s162, %s164
      %p168 = scmp.eq.s32.totalorder %s23, 0
      %p169 = por %p167, %p168
      %p170 = scmp.ne.s32.totalorder %s162, %s164
      %p171 = scmp.eq.s32.totalorder %s28, 1
      %p172 = por %p170, %p171
      %p173 = scmp.ne.s32.totalorder %s164, %s165
      %p174 = scmp.eq.s32.totalorder %s28, 0
      %p175 = por %p173, %p174
      %p176 = scmp.ne.s32.totalorder %s164, %s165
      %p177 = scmp.eq.s32.totalorder %s29, 1
      %p178 = por %p176, %p177
      %p180 = scmp.ne.s32.totalorder %s165, %s179
      %p181 = scmp.eq.s32.totalorder %s29, 0
      %p182 = por %p180, %p181
      %s184 = sadd.s32 %s183, 1
      %p187 = scmp.eq.s32.totalorder %s23, 1
      %p188 = scmp.ne.s32.totalorder %s183, %s185
      %p189 = scmp.eq.s32.totalorder %s23, 0
      %p190 = por %p188, %p189
      %p191 = scmp.ne.s32.totalorder %s183, %s185
      %p192 = scmp.eq.s32.totalorder %s28, 1
      %p193 = por %p191, %p192
      %p194 = scmp.ne.s32.totalorder %s185, %s186
      %p195 = scmp.eq.s32.totalorder %s28, 0
      %p196 = por %p194, %p195
      %p197 = scmp.ne.s32.totalorder %s185, %s186
      %p198 = scmp.eq.s32.totalorder %s29, 1
      %p199 = por %p197, %p198
      %p201 = scmp.ne.s32.totalorder %s186, %s200
      %p202 = scmp.eq.s32.totalorder %s29, 0
      %p203 = por %p201, %p202
      %s205 = sadd.s32 %s204, 1
      %p208 = scmp.eq.s32.totalorder %s23, 1
      %p209 = scmp.ne.s32.totalorder %s204, %s206
      %p210 = scmp.eq.s32.totalorder %s23, 0
      %p211 = por %p209, %p210
      %p212 = scmp.ne.s32.totalorder %s204, %s206
      %p213 = scmp.eq.s32.totalorder %s28, 1
      %p214 = por %p212, %p213
      %p215 = scmp.ne.s32.totalorder %s206, %s207
      %p216 = scmp.eq.s32.totalorder %s28, 0
      %p217 = por %p215, %p216
      %p218 = scmp.ne.s32.totalorder %s206, %s207
      %p219 = scmp.eq.s32.totalorder %s29, 1
      %p220 = por %p218, %p219
      %p222 = scmp.ne.s32.totalorder %s207, %s221
      %p223 = scmp.eq.s32.totalorder %s29, 0
      %p224 = por %p222, %p223
      %s225 = ssub.s32 %s23, %s30
      %p226 = scmp.eq.s32.totalorder %s225, 0
      %s228 = sadd.s32 %s227, 1
      %s229 = scalar_select %p226, %s227, %s228
      %p232 = pneg %p226
      %p233 = scmp.eq.s32.totalorder %s23, 1
      %p234 = por %p232, %p233
      %p235 = scmp.ne.s32.totalorder %s227, %s230
      %p236 = scmp.eq.s32.totalorder %s23, 0
      %p237 = por %p235, %p236
      %p238 = scmp.ne.s32.totalorder %s227, %s230
      %p239 = scmp.eq.s32.totalorder %s28, 1
      %p240 = por %p238, %p239
      %p241 = scmp.ne.s32.totalorder %s230, %s231
      %p242 = scmp.eq.s32.totalorder %s28, 0
      %p243 = por %p241, %p242
      %p244 = scmp.ne.s32.totalorder %s230, %s231
      %p245 = scmp.eq.s32.totalorder %s29, 1
      %p246 = por %p244, %p245
      %p248 = scmp.ne.s32.totalorder %s231, %s247
      %p249 = scmp.eq.s32.totalorder %s29, 0
      %p250 = por %p248, %p249
      %p251 = scmp.le.s32.totalorder 1, %s23
      %p252 = scmp.lt.s32.totalorder %s23, 3
      %p253 = pnand %p251, %p252
      %p254 = pneg %p253
      // Predicated region
      $region9: #{tpu_custom_call.1} parent=5 // pred_check
        _
      $region10: #{tpu_custom_call.1} parent=5 // pred_check_branch
        %256 = sbr.rel (%p253) target = $region12
      $region11: #{tpu_custom_call.1} parent=5 // pred_region
        %s257 = ssub.s32 %s23, 1
        // Predicated region
        $region13: #{tpu_custom_call.1} parent=11 // pred_check
          %p258 = pneg %p70
        $region14: #{tpu_custom_call.1} parent=11 // pred_check_branch
          %260 = sbr.rel (%p258) target = $region16
        $region15: #{tpu_custom_call.1} parent=11 // pred_region
          %262 = vsyncadd [#allocation6], 0
          %s263 = sshll.u32 %s1, 4
          %s264 = int_to_ptr.hbm [resolvable:$true] %s263
          %s265 = sshll.u32 [#allocation5], 4
          %s266 = int_to_ptr.vmem [resolvable:$true] %s265
          %271 = dma.hbm_to_vmem [thread:$0]  %s264, 1024, %s266, [#allocation6], 64, 64, 4
        $region16: #{tpu_custom_call.1} parent=11 // pred_fallthru
          _
        // Predicated region
        $region17: #{tpu_custom_call.1} parent=11 // pred_check
          %p272 = pneg %p91
        $region18: #{tpu_custom_call.1} parent=11 // pred_check_branch
          %274 = sbr.rel (%p272) target = $region20
        $region19: #{tpu_custom_call.1} parent=11 // pred_region
          _
        $region20: #{tpu_custom_call.1} parent=11 // pred_fallthru
          _
        // Predicated region
        $region21: #{tpu_custom_call.1} parent=11 // pred_check
          %p275 = pneg %p112
        $region22: #{tpu_custom_call.1} parent=11 // pred_check_branch
          %277 = sbr.rel (%p275) target = $region24
        $region23: #{tpu_custom_call.1} parent=11 // pred_region
          %279 = vsyncadd [#allocation6], 0
          %s280 = sshll.u32 %s3, 4
          %s281 = int_to_ptr.hbm [resolvable:$true] %s280
          %s282 = sshll.u32 [#allocation7], 4
          %s283 = int_to_ptr.vmem [resolvable:$true] %s282
          %288 = dma.hbm_to_vmem [thread:$0]  %s281, 1024, %s283, [#allocation6], 64, 64, 4
        $region24: #{tpu_custom_call.1} parent=11 // pred_fallthru
          _
        // Predicated region
        $region25: #{tpu_custom_call.1} parent=11 // pred_check
          %p289 = pneg %p133
        $region26: #{tpu_custom_call.1} parent=11 // pred_check_branch
          %291 = sbr.rel (%p289) target = $region28
        $region27: #{tpu_custom_call.1} parent=11 // pred_region
          _
        $region28: #{tpu_custom_call.1} parent=11 // pred_fallthru
          _
        // Predicated region
        $region29: #{tpu_custom_call.1} parent=11 // pred_check
          %p292 = pneg %p154
        $region30: #{tpu_custom_call.1} parent=11 // pred_check_branch
          %294 = sbr.rel (%p292) target = $region32
        $region31: #{tpu_custom_call.1} parent=11 // pred_region
          %296 = vsyncadd [#allocation9], 0
          %s297 = sshll.u32 %s5, 4
          %s298 = int_to_ptr.hbm [resolvable:$true] %s297
          %s299 = sshll.u32 [#allocation8], 4
          %s300 = int_to_ptr.vmem [resolvable:$true] %s299
          %305 = dma.hbm_to_vmem [thread:$0]  %s298, 1024, %s300, [#allocation9], 64, 64, 4
        $region32: #{tpu_custom_call.1} parent=11 // pred_fallthru
          _
        // Predicated region
        $region33: #{tpu_custom_call.1} parent=11 // pred_check
          %p306 = pneg %p175
        $region34: #{tpu_custom_call.1} parent=11 // pred_check_branch
          %308 = sbr.rel (%p306) target = $region36
        $region35: #{tpu_custom_call.1} parent=11 // pred_region
          _
        $region36: #{tpu_custom_call.1} parent=11 // pred_fallthru
          _
        // Predicated region
        $region37: #{tpu_custom_call.1} parent=11 // pred_check
          %p309 = pneg %p196
        $region38: #{tpu_custom_call.1} parent=11 // pred_check_branch
          %311 = sbr.rel (%p309) target = $region40
        $region39: #{tpu_custom_call.1} parent=11 // pred_region
          %313 = vsyncadd [#allocation9], 0
          %s314 = sshll.u32 %s7, 4
          %s315 = int_to_ptr.hbm [resolvable:$true] %s314
          %s316 = sshll.u32 [#allocation10], 4
          %s317 = int_to_ptr.vmem [resolvable:$true] %s316
          %322 = dma.hbm_to_vmem [thread:$0]  %s315, 1024, %s317, [#allocation9], 64, 64, 4
        $region40: #{tpu_custom_call.1} parent=11 // pred_fallthru
          _
        // Predicated region
        $region41: #{tpu_custom_call.1} parent=11 // pred_check
          %p323 = pneg %p217
        $region42: #{tpu_custom_call.1} parent=11 // pred_check_branch
          %325 = sbr.rel (%p323) target = $region44
        $region43: #{tpu_custom_call.1} parent=11 // pred_region
          _
        $region44: #{tpu_custom_call.1} parent=11 // pred_fallthru
          _
      $region12: #{tpu_custom_call.1} parent=5 // pred_fallthru
        _
      %p326 = scmp.lt.s32.totalorder %s23, 2
      // Predicated region
      $region45: #{tpu_custom_call.1} parent=5 // pred_check
        %p327 = pneg %p326
      $region46: #{tpu_custom_call.1} parent=5 // pred_check_branch
        %329 = sbr.rel (%p327) target = $region48
      $region47: #{tpu_custom_call.1} parent=5 // pred_region
        // Predicated region
        $region49: #{tpu_custom_call.1} parent=47 // pred_check
          %p330 = pneg %p43
        $region50: #{tpu_custom_call.1} parent=47 // pred_check_branch
          %332 = sbr.rel (%p330) target = $region52
        $region51: #{tpu_custom_call.1} parent=47 // pred_region
          %s333 = sand.u32 %s33, 1
          %s334 = scalar_lea.sflag [#allocation3], %s333
          %s335 = sand.u32 %s33, 1
          %s336 = smul.addr %s335, 8
          %s337 = scalar_lea.vmem [#allocation2], %s336
          %339 = vsyncadd %s334, 0
          %s340 = smul.addr %s23, 8
          %s341 = scalar_lea.hbm %s0, %s340
          %s343 = sshll.u32 %s341, 4
          %s344 = int_to_ptr.hbm [resolvable:$true] %s343
          %s345 = sshll.u32 %s337, 4
          %s346 = int_to_ptr.vmem [resolvable:$true] %s345
          %348 = dma.hbm_to_vmem [thread:$0]  %s344, 128, %s346, %s334
        $region52: #{tpu_custom_call.1} parent=47 // pred_fallthru
          _
      $region48: #{tpu_custom_call.1} parent=5 // pred_fallthru
        _
      %p349 = scmp.le.s32.totalorder 1, %s23
      %p350 = scmp.lt.s32.totalorder %s23, 3
      %p351 = pnand %p349, %p350
      %p352 = pneg %p351
      // Predicated region
      $region53: #{tpu_custom_call.1} parent=5 // pred_check
        _
      $region54: #{tpu_custom_call.1} parent=5 // pred_check_branch
        %354 = sbr.rel (%p351) target = $region56
      $region55: #{tpu_custom_call.1} parent=5 // pred_region
        %s355 = ssub.s32 %s23, 1
        %s356 = sand.u32 %s36, 1
        %s357 = scalar_lea.sflag [#allocation3], %s356
        %s358 = sand.u32 %s36, 1
        %s359 = smul.addr %s358, 8
        %s360 = scalar_lea.vmem [#allocation2], %s359
        // Predicated region
        $region57: #{tpu_custom_call.1} parent=55 // pred_check
          %p361 = pneg %p49
        $region58: #{tpu_custom_call.1} parent=55 // pred_check_branch
          %363 = sbr.rel (%p361) target = $region60
        $region59: #{tpu_custom_call.1} parent=55 // pred_region
          %365 = dma.done %s357, 128
        $region60: #{tpu_custom_call.1} parent=55 // pred_fallthru
          _
        // Predicated region
        $region61: #{tpu_custom_call.1} parent=55 // pred_check
          %p366 = pneg %p70
        $region62: #{tpu_custom_call.1} parent=55 // pred_check_branch
          %368 = sbr.rel (%p366) target = $region64
        $region63: #{tpu_custom_call.1} parent=55 // pred_region
          %370 = dma.done [#allocation6], 1024
        $region64: #{tpu_custom_call.1} parent=55 // pred_fallthru
          _
        // Predicated region
        $region65: #{tpu_custom_call.1} parent=55 // pred_check
          %p371 = pneg %p112
        $region66: #{tpu_custom_call.1} parent=55 // pred_check_branch
          %373 = sbr.rel (%p371) target = $region68
        $region67: #{tpu_custom_call.1} parent=55 // pred_region
          %375 = dma.done [#allocation6], 1024
        $region68: #{tpu_custom_call.1} parent=55 // pred_fallthru
          _
        // Predicated region
        $region69: #{tpu_custom_call.1} parent=55 // pred_check
          %p376 = pneg %p154
        $region70: #{tpu_custom_call.1} parent=55 // pred_check_branch
          %378 = sbr.rel (%p376) target = $region72
        $region71: #{tpu_custom_call.1} parent=55 // pred_region
          %380 = dma.done [#allocation9], 1024
        $region72: #{tpu_custom_call.1} parent=55 // pred_fallthru
          _
        // Predicated region
        $region73: #{tpu_custom_call.1} parent=55 // pred_check
          %p381 = pneg %p196
        $region74: #{tpu_custom_call.1} parent=55 // pred_check_branch
          %383 = sbr.rel (%p381) target = $region76
        $region75: #{tpu_custom_call.1} parent=55 // pred_region
          %385 = dma.done [#allocation9], 1024
        $region76: #{tpu_custom_call.1} parent=55 // pred_fallthru
          _
        %s386 = sand.u32 %s36, 1
        %s387 = scalar_lea.sflag [#allocation3], %s386
        %s388 = sand.u32 %s36, 1
        %s389 = smul.addr %s388, 8
        %s390 = scalar_lea.vmem [#allocation2], %s389
        %p391 = pneg %p49
        %p392 = pneg %p46
        %p393 = pneg %p70
        %p394 = pneg %p67
        %p395 = pneg %p91
        %p396 = pneg %p88
        %p397 = pneg %p112
        %p398 = pneg %p109
        %p399 = pneg %p133
        %p400 = pneg %p130
        %p401 = pneg %p154
        %p402 = pneg %p151
        %p403 = pneg %p175
        %p404 = pneg %p172
        %p405 = pneg %p196
        %p406 = pneg %p193
        %p407 = pneg %p217
        %p408 = pneg %p214
        %p409 = pneg %p243
        %p410 = pneg %p240
        %s411 = sand.u32 %s230, 1
        %s412 = scalar_lea.sflag [#allocation4], %s411
        %s413 = sand.u32 %s230, 1
        %s414 = smul.addr %s413, 8
        %s415 = scalar_lea.vmem [#allocation11], %s414
        %v416 = vld [vmem:[%s360] sm:$0xff]
        %v417 = vpack.c.bf16 %v416, %v416
        %v418 = vld [vmem:[#allocation5] sm:$0xf]
        %v419 = vld [vmem:[#allocation5 + $0x4] sm:$0xf]
        %v420 = vld [vmem:[#allocation5 + $0x8] sm:$0xf]
        %v421 = vld [vmem:[#allocation5 + $0xc] sm:$0xf]
        %v422 = vld [vmem:[#allocation5 + $0x10] sm:$0xf]
        %v423 = vld [vmem:[#allocation5 + $0x14] sm:$0xf]
        %v424 = vld [vmem:[#allocation5 + $0x18] sm:$0xf]
        %v425 = vld [vmem:[#allocation5 + $0x1c] sm:$0xf]
        %v426 = vld [vmem:[#allocation5 + $0x20] sm:$0xf]
        %v427 = vld [vmem:[#allocation5 + $0x24] sm:$0xf]
        %v428 = vld [vmem:[#allocation5 + $0x28] sm:$0xf]
        %v429 = vld [vmem:[#allocation5 + $0x2c] sm:$0xf]
        %v430 = vld [vmem:[#allocation5 + $0x30] sm:$0xf]
        %v431 = vld [vmem:[#allocation5 + $0x34] sm:$0xf]
        %v432 = vld [vmem:[#allocation5 + $0x38] sm:$0xf]
        %v433 = vld [vmem:[#allocation5 + $0x3c] sm:$0xf]
        %v434 = vld [vmem:[%s2] sm:$0x1]
        %v436 = vperm.slane %v434, 0
        %v454 = vunpack.c.l.b16 %v418
        %v455 = vunpack.c.l.b16 %v419
        %v456 = vunpack.c.l.b16 %v420
        %v457 = vunpack.c.l.b16 %v421
        %v458 = vunpack.c.l.b16 %v422
        %v459 = vunpack.c.l.b16 %v423
        %v460 = vunpack.c.l.b16 %v424
        %v461 = vunpack.c.l.b16 %v425
        %v462 = vunpack.c.l.b16 %v426
        %v463 = vunpack.c.l.b16 %v427
        %v464 = vunpack.c.l.b16 %v428
        %v465 = vunpack.c.l.b16 %v429
        %v466 = vunpack.c.l.b16 %v430
        %v467 = vunpack.c.l.b16 %v431
        %v468 = vunpack.c.l.b16 %v432
        %v469 = vunpack.c.l.b16 %v433
        %v470 = vpack.c.b16 %v455, %v454
        %v471 = vpack.c.b16 %v457, %v456
        %v472 = vpack.c.b16 %v459, %v458
        %v473 = vpack.c.b16 %v461, %v460
        %v474 = vpack.c.b16 %v463, %v462
        %v475 = vpack.c.b16 %v465, %v464
        %v476 = vpack.c.b16 %v467, %v466
        %v477 = vpack.c.b16 %v469, %v468
        %486 = vmatpush.bf16.msra.mxu0 %v477
        %487 = vmatpush.bf16.msra.mxu0 %v476
        %488 = vmatpush.bf16.msra.mxu0 %v475
        %489 = vmatpush.bf16.msra.mxu0 %v474
        %490 = vmatpush.bf16.msra.mxu0 %v473
        %491 = vmatpush.bf16.msra.mxu0 %v472
        %492 = vmatpush.bf16.msra.mxu0 %v471
        %493 = vmatpush.bf16.msra.mxu0 %v470
        %494 = vmatmul.bf16.gmra.mxu0 %v417
        %v495 = vpop.f32.mrf.mxu0
        %v496 = vadd.f32 %v436, %v495
        %v497 = vpop.f32.mrf.mxu0
        %498 = vdwg.mxu0
        %v499 = vmax.f32 %v496, 0.0
        %v500 = vpack.c.bf16 %v499, %v499
        %v501 = vld [vmem:[#allocation7] sm:$0xf]
        %v502 = vld [vmem:[#allocation7 + $0x4] sm:$0xf]
        %v503 = vld [vmem:[#allocation7 + $0x8] sm:$0xf]
        %v504 = vld [vmem:[#allocation7 + $0xc] sm:$0xf]
        %v505 = vld [vmem:[#allocation7 + $0x10] sm:$0xf]
        %v506 = vld [vmem:[#allocation7 + $0x14] sm:$0xf]
        %v507 = vld [vmem:[#allocation7 + $0x18] sm:$0xf]
        %v508 = vld [vmem:[#allocation7 + $0x1c] sm:$0xf]
        %v509 = vld [vmem:[#allocation7 + $0x20] sm:$0xf]
        %v510 = vld [vmem:[#allocation7 + $0x24] sm:$0xf]
        %v511 = vld [vmem:[#allocation7 + $0x28] sm:$0xf]
        %v512 = vld [vmem:[#allocation7 + $0x2c] sm:$0xf]
        %v513 = vld [vmem:[#allocation7 + $0x30] sm:$0xf]
        %v514 = vld [vmem:[#allocation7 + $0x34] sm:$0xf]
        %v515 = vld [vmem:[#allocation7 + $0x38] sm:$0xf]
        %v516 = vld [vmem:[#allocation7 + $0x3c] sm:$0xf]
        %v517 = vld [vmem:[%s4] sm:$0x1]
        %v519 = vperm.slane %v517, 0
        %v537 = vunpack.c.l.b16 %v501
        %v538 = vunpack.c.l.b16 %v502
        %v539 = vunpack.c.l.b16 %v503
        %v540 = vunpack.c.l.b16 %v504
        %v541 = vunpack.c.l.b16 %v505
        %v542 = vunpack.c.l.b16 %v506
        %v543 = vunpack.c.l.b16 %v507
        %v544 = vunpack.c.l.b16 %v508
        %v545 = vunpack.c.l.b16 %v509
        %v546 = vunpack.c.l.b16 %v510
        %v547 = vunpack.c.l.b16 %v511
        %v548 = vunpack.c.l.b16 %v512
        %v549 = vunpack.c.l.b16 %v513
        %v550 = vunpack.c.l.b16 %v514
        %v551 = vunpack.c.l.b16 %v515
        %v552 = vunpack.c.l.b16 %v516
        %v553 = vpack.c.b16 %v538, %v537
        %v554 = vpack.c.b16 %v540, %v539
        %v555 = vpack.c.b16 %v542, %v541
        %v556 = vpack.c.b16 %v544, %v543
        %v557 = vpack.c.b16 %v546, %v545
        %v558 = vpack.c.b16 %v548, %v547
        %v559 = vpack.c.b16 %v550, %v549
        %v560 = vpack.c.b16 %v552, %v551
        %569 = vmatpush.bf16.msra.mxu0 %v560
        %570 = vmatpush.bf16.msra.mxu0 %v559
        %571 = vmatpush.bf16.msra.mxu0 %v558
        %572 = vmatpush.bf16.msra.mxu0 %v557
        %573 = vmatpush.bf16.msra.mxu0 %v556
        %574 = vmatpush.bf16.msra.mxu0 %v555
        %575 = vmatpush.bf16.msra.mxu0 %v554
        %576 = vmatpush.bf16.msra.mxu0 %v553
        %577 = vmatmul.bf16.gmra.mxu0 %v500
        %v578 = vpop.f32.mrf.mxu0
        %v579 = vadd.f32 %v519, %v578
        %v580 = vpop.f32.mrf.mxu0
        %581 = vdwg.mxu0
        %v582 = vmax.f32 %v579, 0.0
        %v583 = vpack.c.bf16 %v582, %v582
        %v584 = vld [vmem:[#allocation8] sm:$0xf]
        %v585 = vld [vmem:[#allocation8 + $0x4] sm:$0xf]
        %v586 = vld [vmem:[#allocation8 + $0x8] sm:$0xf]
        %v587 = vld [vmem:[#allocation8 + $0xc] sm:$0xf]
        %v588 = vld [vmem:[#allocation8 + $0x10] sm:$0xf]
        %v589 = vld [vmem:[#allocation8 + $0x14] sm:$0xf]
        %v590 = vld [vmem:[#allocation8 + $0x18] sm:$0xf]
        %v591 = vld [vmem:[#allocation8 + $0x1c] sm:$0xf]
        %v592 = vld [vmem:[#allocation8 + $0x20] sm:$0xf]
        %v593 = vld [vmem:[#allocation8 + $0x24] sm:$0xf]
        %v594 = vld [vmem:[#allocation8 + $0x28] sm:$0xf]
        %v595 = vld [vmem:[#allocation8 + $0x2c] sm:$0xf]
        %v596 = vld [vmem:[#allocation8 + $0x30] sm:$0xf]
        %v597 = vld [vmem:[#allocation8 + $0x34] sm:$0xf]
        %v598 = vld [vmem:[#allocation8 + $0x38] sm:$0xf]
        %v599 = vld [vmem:[#allocation8 + $0x3c] sm:$0xf]
        %v600 = vld [vmem:[%s6] sm:$0x1]
        %v602 = vperm.slane %v600, 0
        %v620 = vunpack.c.l.b16 %v584
        %v621 = vunpack.c.l.b16 %v585
        %v622 = vunpack.c.l.b16 %v586
        %v623 = vunpack.c.l.b16 %v587
        %v624 = vunpack.c.l.b16 %v588
        %v625 = vunpack.c.l.b16 %v589
        %v626 = vunpack.c.l.b16 %v590
        %v627 = vunpack.c.l.b16 %v591
        %v628 = vunpack.c.l.b16 %v592
        %v629 = vunpack.c.l.b16 %v593
        %v630 = vunpack.c.l.b16 %v594
        %v631 = vunpack.c.l.b16 %v595
        %v632 = vunpack.c.l.b16 %v596
        %v633 = vunpack.c.l.b16 %v597
        %v634 = vunpack.c.l.b16 %v598
        %v635 = vunpack.c.l.b16 %v599
        %v636 = vpack.c.b16 %v621, %v620
        %v637 = vpack.c.b16 %v623, %v622
        %v638 = vpack.c.b16 %v625, %v624
        %v639 = vpack.c.b16 %v627, %v626
        %v640 = vpack.c.b16 %v629, %v628
        %v641 = vpack.c.b16 %v631, %v630
        %v642 = vpack.c.b16 %v633, %v632
        %v643 = vpack.c.b16 %v635, %v634
        %652 = vmatpush.bf16.msra.mxu0 %v643
        %653 = vmatpush.bf16.msra.mxu0 %v642
        %654 = vmatpush.bf16.msra.mxu0 %v641
        %655 = vmatpush.bf16.msra.mxu0 %v640
        %656 = vmatpush.bf16.msra.mxu0 %v639
        %657 = vmatpush.bf16.msra.mxu0 %v638
        %658 = vmatpush.bf16.msra.mxu0 %v637
        %659 = vmatpush.bf16.msra.mxu0 %v636
        %660 = vmatmul.bf16.gmra.mxu0 %v583
        %v661 = vpop.f32.mrf.mxu0
        %v662 = vadd.f32 %v602, %v661
        %v663 = vpop.f32.mrf.mxu0
        %664 = vdwg.mxu0
        %v665 = vmax.f32 %v662, 0.0
        %v666 = vpack.c.bf16 %v665, %v665
        %v667 = vld [vmem:[#allocation10] sm:$0xf]
        %v668 = vld [vmem:[#allocation10 + $0x4] sm:$0xf]
        %v669 = vld [vmem:[#allocation10 + $0x8] sm:$0xf]
        %v670 = vld [vmem:[#allocation10 + $0xc] sm:$0xf]
        %v671 = vld [vmem:[#allocation10 + $0x10] sm:$0xf]
        %v672 = vld [vmem:[#allocation10 + $0x14] sm:$0xf]
        %v673 = vld [vmem:[#allocation10 + $0x18] sm:$0xf]
        %v674 = vld [vmem:[#allocation10 + $0x1c] sm:$0xf]
        %v675 = vld [vmem:[#allocation10 + $0x20] sm:$0xf]
        %v676 = vld [vmem:[#allocation10 + $0x24] sm:$0xf]
        %v677 = vld [vmem:[#allocation10 + $0x28] sm:$0xf]
        %v678 = vld [vmem:[#allocation10 + $0x2c] sm:$0xf]
        %v679 = vld [vmem:[#allocation10 + $0x30] sm:$0xf]
        %v680 = vld [vmem:[#allocation10 + $0x34] sm:$0xf]
        %v681 = vld [vmem:[#allocation10 + $0x38] sm:$0xf]
        %v682 = vld [vmem:[#allocation10 + $0x3c] sm:$0xf]
        %v683 = vld [vmem:[%s8] sm:$0x1]
        %v685 = vperm.slane %v683, 0
        %v703 = vunpack.c.l.b16 %v667
        %v704 = vunpack.c.l.b16 %v668
        %v705 = vunpack.c.l.b16 %v669
        %v706 = vunpack.c.l.b16 %v670
        %v707 = vunpack.c.l.b16 %v671
        %v708 = vunpack.c.l.b16 %v672
        %v709 = vunpack.c.l.b16 %v673
        %v710 = vunpack.c.l.b16 %v674
        %v711 = vunpack.c.l.b16 %v675
        %v712 = vunpack.c.l.b16 %v676
        %v713 = vunpack.c.l.b16 %v677
        %v714 = vunpack.c.l.b16 %v678
        %v715 = vunpack.c.l.b16 %v679
        %v716 = vunpack.c.l.b16 %v680
        %v717 = vunpack.c.l.b16 %v681
        %v718 = vunpack.c.l.b16 %v682
        %v719 = vpack.c.b16 %v704, %v703
        %v720 = vpack.c.b16 %v706, %v705
        %v721 = vpack.c.b16 %v708, %v707
        %v722 = vpack.c.b16 %v710, %v709
        %v723 = vpack.c.b16 %v712, %v711
        %v724 = vpack.c.b16 %v714, %v713
        %v725 = vpack.c.b16 %v716, %v715
        %v726 = vpack.c.b16 %v718, %v717
        %735 = vmatpush.bf16.msra.mxu0 %v726
        %736 = vmatpush.bf16.msra.mxu0 %v725
        %737 = vmatpush.bf16.msra.mxu0 %v724
        %738 = vmatpush.bf16.msra.mxu0 %v723
        %739 = vmatpush.bf16.msra.mxu0 %v722
        %740 = vmatpush.bf16.msra.mxu0 %v721
        %741 = vmatpush.bf16.msra.mxu0 %v720
        %742 = vmatpush.bf16.msra.mxu0 %v719
        %743 = vmatmul.bf16.gmra.mxu0 %v666
        %v744 = vpop.f32.mrf.mxu0
        %v745 = vadd.f32 %v685, %v744
        %v746 = vpop.f32.mrf.mxu0
        %747 = vdwg.mxu0
        %748 = vst [vmem:[%s415] sm:$0xff] %v745
        %s749 = sand.u32 %s230, 1
        %s750 = scalar_lea.sflag [#allocation4], %s749
        %s751 = sand.u32 %s230, 1
        %s752 = smul.addr %s751, 8
        %s753 = scalar_lea.vmem [#allocation11], %s752
        // Predicated region
        $region77: #{tpu_custom_call.1} parent=55 // pred_check
          %p754 = pneg %p240
        $region78: #{tpu_custom_call.1} parent=55 // pred_check_branch
          %756 = sbr.rel (%p754) target = $region80
        $region79: #{tpu_custom_call.1} parent=55 // pred_region
          %758 = vsyncadd %s750, 0
          %s759 = smul.addr %s28, 8
          %s760 = scalar_lea.hbm %s9, %s759
          %s762 = sshll.u32 %s753, 4
          %s763 = int_to_ptr.vmem [resolvable:$true] %s762
          %s764 = sshll.u32 %s760, 4
          %s765 = int_to_ptr.hbm [resolvable:$true] %s764
          %767 = dma.vmem_to_hbm [thread:$0]  %s763, 128, %s765, %s750
        $region80: #{tpu_custom_call.1} parent=55 // pred_fallthru
          _
      $region56: #{tpu_custom_call.1} parent=5 // pred_fallthru
        _
      %p768 = scmp.le.s32.totalorder 2, %s23
      // Predicated region
      $region81: #{tpu_custom_call.1} parent=5 // pred_check
        %p769 = pneg %p768
      $region82: #{tpu_custom_call.1} parent=5 // pred_check_branch
        %771 = sbr.rel (%p769) target = $region84
      $region83: #{tpu_custom_call.1} parent=5 // pred_region
        %s772 = ssub.s32 %s23, 2
        // Predicated region
        $region85: #{tpu_custom_call.1} parent=83 // pred_check
          %p773 = pneg %p246
        $region86: #{tpu_custom_call.1} parent=83 // pred_check_branch
          %775 = sbr.rel (%p773) target = $region88
        $region87: #{tpu_custom_call.1} parent=83 // pred_region
          %s776 = sand.u32 %s231, 1
          %s777 = scalar_lea.sflag [#allocation4], %s776
          %s778 = sand.u32 %s231, 1
          %s779 = smul.addr %s778, 8
          %s780 = scalar_lea.vmem [#allocation11], %s779
          %782 = dma.done %s777, 128
        $region88: #{tpu_custom_call.1} parent=83 // pred_fallthru
          _
      $region84: #{tpu_custom_call.1} parent=5 // pred_fallthru
        _
    $region6: #{tpu_custom_call.1} parent=1 // loop_footer
      %s27 = sadd.s32 1, %s23
    $region7: #{tpu_custom_call.1} parent=1 // loop_footer_branch
      %22 = sbr.rel target = $region3
    $region8: #{tpu_custom_call.1} parent=1 // loop_exit
      _
    %783 = vsyncpa [#allocation3], 1
    %s784 = scalar_lea.sflag [#allocation3], 1
    %785 = vsyncpa %s784, 1
    %786 = vsyncpa [#allocation6], 1
    %787 = vsyncpa [#allocation9], 1
    %788 = vsyncpa [#allocation4], 1
    %s789 = scalar_lea.sflag [#allocation4], 1
    %790 = vsyncpa %s789, 1

</llo_original>
